<compile_context>
chip_gen: v5e
topology: v5e:2x2
jax: 0.10.0
libtpu: 0.0.40
codegen_flags: <defaults>
</compile_context>

<pallas_src>
import functools
import math

import jax
import jax.numpy as jnp
import numpy as np
from jax.experimental import pallas as pl
from jax.experimental.pallas import tpu as pltpu


def _round_up(x, m):
    return (x + m - 1) // m * m


def _word_embed_kernel(ids_ref, tok_hbm, pe_ref, out_ref, rows, sems, *, ts):
    # ids_ref : (B, S_pad) int32 in SMEM (scalar-prefetched token ids)
    # tok_hbm : (V, E) embedding table, raw HBM ref (memory_space=pl.ANY)
    # pe_ref  : (S_pad, E) positional-encoding slab, VMEM-resident (loaded once)
    # out_ref : (1, TS, E) output tile
    # rows    : (TS, E) VMEM scratch for the gathered embedding rows
    # sems    : (TS,) DMA semaphores, one per in-flight row fetch
    b = pl.program_id(0)
    st = pl.program_id(1)
    base = st * ts

    # Issue all row-gather DMAs for this tile up front; they overlap in the DMA
    # engine so we pay ~one HBM-row latency per tile, not per token.
    copies = []
    for t in range(ts):
        tok = ids_ref[b, base + t]
        cp = pltpu.make_async_copy(
            tok_hbm.at[pl.ds(tok, 1), :],
            rows.at[pl.ds(t, 1), :],
            sems.at[t],
        )
        cp.start()
        copies.append(cp)

    # Positional rows for this tile (slab already in VMEM; zero extra DMA).
    pe_tile = pe_ref[pl.ds(pl.multiple_of(base, 8), ts), :]

    for cp in copies:
        cp.wait()

    tile = rows[...].astype(jnp.float32) + pe_tile
    out_ref[...] = tile.reshape(out_ref.shape).astype(out_ref.dtype)


def word_embedding_forward(sequence, token_table, pe_table):
    """Eval-mode WordEmbedding forward.

    sequence:    (B, S) integer token ids
    token_table: (V, E) nn.Embedding weight
    pe_table:    (max_len, E) sinusoidal positional encodings
    returns:     (B, S, E) float32, token_table[sequence] + pe_table[:S]
    """
    B, S = sequence.shape
    V, E = token_table.shape
    max_len = pe_table.shape[0]

    # Tokens per grid step: sublane-full (multiple of 8).  The per-row gather
    # DMAs are unrolled, so cap the tile to keep code size / semaphore count
    # modest; larger tiles would switch to grouped DMAs.
    ts = min(_round_up(S, 8), 32)
    s_pad = _round_up(S, ts)

    # Clamp ids so no out-of-bounds DMA is possible, pad sequence axis to tile.
    ids = jnp.clip(sequence.astype(jnp.int32), 0, V - 1)
    if s_pad != S:
        ids = jnp.pad(ids, ((0, 0), (0, s_pad - S)))

    # Positional slab actually needed by this call (rows past max_len, if any
    # due to padding, are zero-filled and sliced away below).
    n_pe = min(s_pad, max_len)
    pe_slab = pe_table[:n_pe].astype(jnp.float32)
    if n_pe != s_pad:
        pe_slab = jnp.pad(pe_slab, ((0, s_pad - n_pe), (0, 0)))

    kernel = functools.partial(_word_embed_kernel, ts=ts)

    grid_spec = pltpu.PrefetchScalarGridSpec(
        num_scalar_prefetch=1,           # token ids -> SMEM, drive the gather DMAs
        grid=(B, s_pad // ts),
        in_specs=[
            # Embedding table stays in HBM; rows are gathered manually.
            pl.BlockSpec(memory_space=pl.ANY),
            # PE slab: constant index_map -> loaded into VMEM exactly once.
            pl.BlockSpec((s_pad, E), lambda b, s, ids: (0, 0)),
        ],
        out_specs=pl.BlockSpec((1, ts, E), lambda b, s, ids: (b, s, 0)),
        scratch_shapes=[
            pltpu.VMEM((ts, E), token_table.dtype),   # gathered embedding rows
            pltpu.SemaphoreType.DMA((ts,)),           # one sem per in-flight row DMA
        ],
    )

    out = pl.pallas_call(
        kernel,
        out_shape=jax.ShapeDtypeStruct((B, s_pad, E), jnp.float32),
        grid_spec=grid_spec,
        compiler_params=pltpu.CompilerParams(
            dimension_semantics=("parallel", "parallel")
        ),
    )(ids, token_table, pe_slab)

    return out[:, :S, :]


def make_positional_embedding(d_model, max_len=512):
    """Matches PositionalEmbedding.__init__ exactly (sin on even, cos on odd)."""
    pe = np.zeros((max_len, d_model), dtype=np.float32)
    position = np.arange(0, max_len, dtype=np.float32)[:, None]
    div_term = np.exp(
        np.arange(0, d_model, 2, dtype=np.float32) * -(math.log(10000.0) / d_model)
    )
    pe[:, 0::2] = np.sin(position * div_term)
    pe[:, 1::2] = np.cos(position * div_term)
    return jnp.asarray(pe)


if __name__ == "__main__":
    # Small, forward-implied shapes.
    vocab_size = 50
    embed_size = 32
    batch = 2
    seq_len = 8
    max_len = 512

    key = jax.random.PRNGKey(0)
    k_tok, k_seq = jax.random.split(key)

    # nn.Embedding default init: N(0, 1)
    token_table = jax.random.normal(k_tok, (vocab_size, embed_size), dtype=jnp.float32)
    pe_table = make_positional_embedding(embed_size, max_len)

    sequence = jax.random.randint(k_seq, (batch, seq_len), 0, vocab_size, dtype=jnp.int32)

    out = word_embedding_forward(sequence, token_table, pe_table)
    out = jax.block_until_ready(out)

    # Reference check in plain JAX (eval-mode dropout == identity).
    ref = token_table[sequence] + pe_table[None, :seq_len, :]
    np.testing.assert_allclose(np.asarray(out), np.asarray(ref), rtol=1e-6, atol=1e-6)

    print("KERNEL_OK")
</pallas_src>

<mosaic_0001>
module attributes {stable_mosaic.version = 11 : i64} {
  func.func @_word_embed_kernel(%arg0: i32, %arg1: i32, %arg2: memref<2x8xi32, #tpu.memory_space<smem>>, %arg3: memref<50x32xf32, #tpu.memory_space<any>>, %arg4: memref<8x32xf32, #tpu.memory_space<vmem>>, %arg5: memref<1x8x32xf32, #tpu.memory_space<vmem>>, %arg6: memref<8x32xf32, #tpu.memory_space<vmem>>, %arg7: memref<8x!tpu.dma_semaphore, #tpu.memory_space<semaphore_mem>>) attributes {dimension_semantics = [#tpu.dimension_semantics<parallel>, #tpu.dimension_semantics<parallel>], iteration_bounds = array<i64: 2, 1>, scalar_prefetch = 1 : i64, scratch_operands = 2 : i64, tpu.core_type = #tpu.core_type<tc>, window_params = [{}, {pipeline_mode = #tpu.pipeline_mode<synchronous>, transform_indices = @transform_1, window_bounds = array<i64: 8, 32>}, {transform_indices = @transform_2, window_bounds = array<i64: 1, 8, 32>}]} {
    %c8_i32 = arith.constant 8 : i32
    %0 = arith.muli %arg1, %c8_i32 : i32
    %c0_i32 = arith.constant 0 : i32
    %1 = arith.addi %0, %c0_i32 : i32
    %2 = arith.index_cast %arg0 : i32 to index
    %3 = arith.index_cast %1 : i32 to index
    %4 = memref.load %arg2[%2, %3] : memref<2x8xi32, #tpu.memory_space<smem>>
    %c0_i32_0 = arith.constant 0 : i32
    %c0_i32_1 = arith.constant 0 : i32
    %5 = tpu.memref_slice %arg3[%4, %c0_i32_1] : memref<50x32xf32, #tpu.memory_space<any>> -> memref<1x32xf32, #tpu.memory_space<any>>
    %c0_i32_2 = arith.constant 0 : i32
    %c0_i32_3 = arith.constant 0 : i32
    %6 = tpu.memref_slice %arg6[%c0_i32_2, %c0_i32_3] : memref<8x32xf32, #tpu.memory_space<vmem>> -> memref<1x32xf32, #tpu.memory_space<vmem>>
    %7 = tpu.memref_slice %arg7[%c0_i32_0] : memref<8x!tpu.dma_semaphore, #tpu.memory_space<semaphore_mem>> -> memref<1x!tpu.dma_semaphore, #tpu.memory_space<semaphore_mem>>
    %8 = tpu.memref_squeeze %7 : memref<1x!tpu.dma_semaphore, #tpu.memory_space<semaphore_mem>> -> memref<!tpu.dma_semaphore, #tpu.memory_space<semaphore_mem>>
    tpu.enqueue_dma source(%5 : memref<1x32xf32, #tpu.memory_space<any>>) target(%6 : memref<1x32xf32, #tpu.memory_space<vmem>>) target_semaphore(%8 : memref<!tpu.dma_semaphore, #tpu.memory_space<semaphore_mem>>)
    %c1_i32 = arith.constant 1 : i32
    %9 = arith.addi %0, %c1_i32 : i32
    %10 = arith.index_cast %arg0 : i32 to index
    %11 = arith.index_cast %9 : i32 to index
    %12 = memref.load %arg2[%10, %11] : memref<2x8xi32, #tpu.memory_space<smem>>
    %c1_i32_4 = arith.constant 1 : i32
    %c0_i32_5 = arith.constant 0 : i32
    %13 = tpu.memref_slice %arg3[%12, %c0_i32_5] : memref<50x32xf32, #tpu.memory_space<any>> -> memref<1x32xf32, #tpu.memory_space<any>>
    %c1_i32_6 = arith.constant 1 : i32
    %c0_i32_7 = arith.constant 0 : i32
    %14 = tpu.memref_slice %arg6[%c1_i32_6, %c0_i32_7] : memref<8x32xf32, #tpu.memory_space<vmem>> -> memref<1x32xf32, #tpu.memory_space<vmem>>
    %15 = tpu.memref_slice %arg7[%c1_i32_4] : memref<8x!tpu.dma_semaphore, #tpu.memory_space<semaphore_mem>> -> memref<1x!tpu.dma_semaphore, #tpu.memory_space<semaphore_mem>>
    %16 = tpu.memref_squeeze %15 : memref<1x!tpu.dma_semaphore, #tpu.memory_space<semaphore_mem>> -> memref<!tpu.dma_semaphore, #tpu.memory_space<semaphore_mem>>
    tpu.enqueue_dma source(%13 : memref<1x32xf32, #tpu.memory_space<any>>) target(%14 : memref<1x32xf32, #tpu.memory_space<vmem>>) target_semaphore(%16 : memref<!tpu.dma_semaphore, #tpu.memory_space<semaphore_mem>>)
    %c2_i32 = arith.constant 2 : i32
    %17 = arith.addi %0, %c2_i32 : i32
    %18 = arith.index_cast %arg0 : i32 to index
    %19 = arith.index_cast %17 : i32 to index
    %20 = memref.load %arg2[%18, %19] : memref<2x8xi32, #tpu.memory_space<smem>>
    %c2_i32_8 = arith.constant 2 : i32
    %c0_i32_9 = arith.constant 0 : i32
    %21 = tpu.memref_slice %arg3[%20, %c0_i32_9] : memref<50x32xf32, #tpu.memory_space<any>> -> memref<1x32xf32, #tpu.memory_space<any>>
    %c2_i32_10 = arith.constant 2 : i32
    %c0_i32_11 = arith.constant 0 : i32
    %22 = tpu.memref_slice %arg6[%c2_i32_10, %c0_i32_11] : memref<8x32xf32, #tpu.memory_space<vmem>> -> memref<1x32xf32, #tpu.memory_space<vmem>>
    %23 = tpu.memref_slice %arg7[%c2_i32_8] : memref<8x!tpu.dma_semaphore, #tpu.memory_space<semaphore_mem>> -> memref<1x!tpu.dma_semaphore, #tpu.memory_space<semaphore_mem>>
    %24 = tpu.memref_squeeze %23 : memref<1x!tpu.dma_semaphore, #tpu.memory_space<semaphore_mem>> -> memref<!tpu.dma_semaphore, #tpu.memory_space<semaphore_mem>>
    tpu.enqueue_dma source(%21 : memref<1x32xf32, #tpu.memory_space<any>>) target(%22 : memref<1x32xf32, #tpu.memory_space<vmem>>) target_semaphore(%24 : memref<!tpu.dma_semaphore, #tpu.memory_space<semaphore_mem>>)
    %c3_i32 = arith.constant 3 : i32
    %25 = arith.addi %0, %c3_i32 : i32
    %26 = arith.index_cast %arg0 : i32 to index
    %27 = arith.index_cast %25 : i32 to index
    %28 = memref.load %arg2[%26, %27] : memref<2x8xi32, #tpu.memory_space<smem>>
    %c3_i32_12 = arith.constant 3 : i32
    %c0_i32_13 = arith.constant 0 : i32
    %29 = tpu.memref_slice %arg3[%28, %c0_i32_13] : memref<50x32xf32, #tpu.memory_space<any>> -> memref<1x32xf32, #tpu.memory_space<any>>
    %c3_i32_14 = arith.constant 3 : i32
    %c0_i32_15 = arith.constant 0 : i32
    %30 = tpu.memref_slice %arg6[%c3_i32_14, %c0_i32_15] : memref<8x32xf32, #tpu.memory_space<vmem>> -> memref<1x32xf32, #tpu.memory_space<vmem>>
    %31 = tpu.memref_slice %arg7[%c3_i32_12] : memref<8x!tpu.dma_semaphore, #tpu.memory_space<semaphore_mem>> -> memref<1x!tpu.dma_semaphore, #tpu.memory_space<semaphore_mem>>
    %32 = tpu.memref_squeeze %31 : memref<1x!tpu.dma_semaphore, #tpu.memory_space<semaphore_mem>> -> memref<!tpu.dma_semaphore, #tpu.memory_space<semaphore_mem>>
    tpu.enqueue_dma source(%29 : memref<1x32xf32, #tpu.memory_space<any>>) target(%30 : memref<1x32xf32, #tpu.memory_space<vmem>>) target_semaphore(%32 : memref<!tpu.dma_semaphore, #tpu.memory_space<semaphore_mem>>)
    %c4_i32 = arith.constant 4 : i32
    %33 = arith.addi %0, %c4_i32 : i32
    %34 = arith.index_cast %arg0 : i32 to index
    %35 = arith.index_cast %33 : i32 to index
    %36 = memref.load %arg2[%34, %35] : memref<2x8xi32, #tpu.memory_space<smem>>
    %c4_i32_16 = arith.constant 4 : i32
    %c0_i32_17 = arith.constant 0 : i32
    %37 = tpu.memref_slice %arg3[%36, %c0_i32_17] : memref<50x32xf32, #tpu.memory_space<any>> -> memref<1x32xf32, #tpu.memory_space<any>>
    %c4_i32_18 = arith.constant 4 : i32
    %c0_i32_19 = arith.constant 0 : i32
    %38 = tpu.memref_slice %arg6[%c4_i32_18, %c0_i32_19] : memref<8x32xf32, #tpu.memory_space<vmem>> -> memref<1x32xf32, #tpu.memory_space<vmem>>
    %39 = tpu.memref_slice %arg7[%c4_i32_16] : memref<8x!tpu.dma_semaphore, #tpu.memory_space<semaphore_mem>> -> memref<1x!tpu.dma_semaphore, #tpu.memory_space<semaphore_mem>>
    %40 = tpu.memref_squeeze %39 : memref<1x!tpu.dma_semaphore, #tpu.memory_space<semaphore_mem>> -> memref<!tpu.dma_semaphore, #tpu.memory_space<semaphore_mem>>
    tpu.enqueue_dma source(%37 : memref<1x32xf32, #tpu.memory_space<any>>) target(%38 : memref<1x32xf32, #tpu.memory_space<vmem>>) target_semaphore(%40 : memref<!tpu.dma_semaphore, #tpu.memory_space<semaphore_mem>>)
    %c5_i32 = arith.constant 5 : i32
    %41 = arith.addi %0, %c5_i32 : i32
    %42 = arith.index_cast %arg0 : i32 to index
    %43 = arith.index_cast %41 : i32 to index
    %44 = memref.load %arg2[%42, %43] : memref<2x8xi32, #tpu.memory_space<smem>>
    %c5_i32_20 = arith.constant 5 : i32
    %c0_i32_21 = arith.constant 0 : i32
    %45 = tpu.memref_slice %arg3[%44, %c0_i32_21] : memref<50x32xf32, #tpu.memory_space<any>> -> memref<1x32xf32, #tpu.memory_space<any>>
    %c5_i32_22 = arith.constant 5 : i32
    %c0_i32_23 = arith.constant 0 : i32
    %46 = tpu.memref_slice %arg6[%c5_i32_22, %c0_i32_23] : memref<8x32xf32, #tpu.memory_space<vmem>> -> memref<1x32xf32, #tpu.memory_space<vmem>>
    %47 = tpu.memref_slice %arg7[%c5_i32_20] : memref<8x!tpu.dma_semaphore, #tpu.memory_space<semaphore_mem>> -> memref<1x!tpu.dma_semaphore, #tpu.memory_space<semaphore_mem>>
    %48 = tpu.memref_squeeze %47 : memref<1x!tpu.dma_semaphore, #tpu.memory_space<semaphore_mem>> -> memref<!tpu.dma_semaphore, #tpu.memory_space<semaphore_mem>>
    tpu.enqueue_dma source(%45 : memref<1x32xf32, #tpu.memory_space<any>>) target(%46 : memref<1x32xf32, #tpu.memory_space<vmem>>) target_semaphore(%48 : memref<!tpu.dma_semaphore, #tpu.memory_space<semaphore_mem>>)
    %c6_i32 = arith.constant 6 : i32
    %49 = arith.addi %0, %c6_i32 : i32
    %50 = arith.index_cast %arg0 : i32 to index
    %51 = arith.index_cast %49 : i32 to index
    %52 = memref.load %arg2[%50, %51] : memref<2x8xi32, #tpu.memory_space<smem>>
    %c6_i32_24 = arith.constant 6 : i32
    %c0_i32_25 = arith.constant 0 : i32
    %53 = tpu.memref_slice %arg3[%52, %c0_i32_25] : memref<50x32xf32, #tpu.memory_space<any>> -> memref<1x32xf32, #tpu.memory_space<any>>
    %c6_i32_26 = arith.constant 6 : i32
    %c0_i32_27 = arith.constant 0 : i32
    %54 = tpu.memref_slice %arg6[%c6_i32_26, %c0_i32_27] : memref<8x32xf32, #tpu.memory_space<vmem>> -> memref<1x32xf32, #tpu.memory_space<vmem>>
    %55 = tpu.memref_slice %arg7[%c6_i32_24] : memref<8x!tpu.dma_semaphore, #tpu.memory_space<semaphore_mem>> -> memref<1x!tpu.dma_semaphore, #tpu.memory_space<semaphore_mem>>
    %56 = tpu.memref_squeeze %55 : memref<1x!tpu.dma_semaphore, #tpu.memory_space<semaphore_mem>> -> memref<!tpu.dma_semaphore, #tpu.memory_space<semaphore_mem>>
    tpu.enqueue_dma source(%53 : memref<1x32xf32, #tpu.memory_space<any>>) target(%54 : memref<1x32xf32, #tpu.memory_space<vmem>>) target_semaphore(%56 : memref<!tpu.dma_semaphore, #tpu.memory_space<semaphore_mem>>)
    %c7_i32 = arith.constant 7 : i32
    %57 = arith.addi %0, %c7_i32 : i32
    %58 = arith.index_cast %arg0 : i32 to index
    %59 = arith.index_cast %57 : i32 to index
    %60 = memref.load %arg2[%58, %59] : memref<2x8xi32, #tpu.memory_space<smem>>
    %c7_i32_28 = arith.constant 7 : i32
    %c0_i32_29 = arith.constant 0 : i32
    %61 = tpu.memref_slice %arg3[%60, %c0_i32_29] : memref<50x32xf32, #tpu.memory_space<any>> -> memref<1x32xf32, #tpu.memory_space<any>>
    %c7_i32_30 = arith.constant 7 : i32
    %c0_i32_31 = arith.constant 0 : i32
    %62 = tpu.memref_slice %arg6[%c7_i32_30, %c0_i32_31] : memref<8x32xf32, #tpu.memory_space<vmem>> -> memref<1x32xf32, #tpu.memory_space<vmem>>
    %63 = tpu.memref_slice %arg7[%c7_i32_28] : memref<8x!tpu.dma_semaphore, #tpu.memory_space<semaphore_mem>> -> memref<1x!tpu.dma_semaphore, #tpu.memory_space<semaphore_mem>>
    %64 = tpu.memref_squeeze %63 : memref<1x!tpu.dma_semaphore, #tpu.memory_space<semaphore_mem>> -> memref<!tpu.dma_semaphore, #tpu.memory_space<semaphore_mem>>
    tpu.enqueue_dma source(%61 : memref<1x32xf32, #tpu.memory_space<any>>) target(%62 : memref<1x32xf32, #tpu.memory_space<vmem>>) target_semaphore(%64 : memref<!tpu.dma_semaphore, #tpu.memory_space<semaphore_mem>>)
    %65 = tpu.assume_multiple %0, 8 : i32
    %66 = arith.index_cast %65 : i32 to index
    %c0 = arith.constant 0 : index
    %67 = vector.load %arg4[%66, %c0] : memref<8x32xf32, #tpu.memory_space<vmem>>, vector<8x32xf32>
    %c0_i32_32 = arith.constant 0 : i32
    %c0_i32_33 = arith.constant 0 : i32
    %68 = tpu.memref_slice %arg3[%4, %c0_i32_33] : memref<50x32xf32, #tpu.memory_space<any>> -> memref<1x32xf32, #tpu.memory_space<any>>
    %c0_i32_34 = arith.constant 0 : i32
    %c0_i32_35 = arith.constant 0 : i32
    %69 = tpu.memref_slice %arg6[%c0_i32_34, %c0_i32_35] : memref<8x32xf32, #tpu.memory_space<vmem>> -> memref<1x32xf32, #tpu.memory_space<vmem>>
    %70 = tpu.memref_slice %arg7[%c0_i32_32] : memref<8x!tpu.dma_semaphore, #tpu.memory_space<semaphore_mem>> -> memref<1x!tpu.dma_semaphore, #tpu.memory_space<semaphore_mem>>
    %71 = tpu.memref_squeeze %70 : memref<1x!tpu.dma_semaphore, #tpu.memory_space<semaphore_mem>> -> memref<!tpu.dma_semaphore, #tpu.memory_space<semaphore_mem>>
    tpu.wait_dma2 semaphore(%71 : memref<!tpu.dma_semaphore, #tpu.memory_space<semaphore_mem>>) src(%68 : memref<1x32xf32, #tpu.memory_space<any>>) dst(%69 : memref<1x32xf32, #tpu.memory_space<vmem>>)
    %c1_i32_36 = arith.constant 1 : i32
    %c0_i32_37 = arith.constant 0 : i32
    %72 = tpu.memref_slice %arg3[%12, %c0_i32_37] : memref<50x32xf32, #tpu.memory_space<any>> -> memref<1x32xf32, #tpu.memory_space<any>>
    %c1_i32_38 = arith.constant 1 : i32
    %c0_i32_39 = arith.constant 0 : i32
    %73 = tpu.memref_slice %arg6[%c1_i32_38, %c0_i32_39] : memref<8x32xf32, #tpu.memory_space<vmem>> -> memref<1x32xf32, #tpu.memory_space<vmem>>
    %74 = tpu.memref_slice %arg7[%c1_i32_36] : memref<8x!tpu.dma_semaphore, #tpu.memory_space<semaphore_mem>> -> memref<1x!tpu.dma_semaphore, #tpu.memory_space<semaphore_mem>>
    %75 = tpu.memref_squeeze %74 : memref<1x!tpu.dma_semaphore, #tpu.memory_space<semaphore_mem>> -> memref<!tpu.dma_semaphore, #tpu.memory_space<semaphore_mem>>
    tpu.wait_dma2 semaphore(%75 : memref<!tpu.dma_semaphore, #tpu.memory_space<semaphore_mem>>) src(%72 : memref<1x32xf32, #tpu.memory_space<any>>) dst(%73 : memref<1x32xf32, #tpu.memory_space<vmem>>)
    %c2_i32_40 = arith.constant 2 : i32
    %c0_i32_41 = arith.constant 0 : i32
    %76 = tpu.memref_slice %arg3[%20, %c0_i32_41] : memref<50x32xf32, #tpu.memory_space<any>> -> memref<1x32xf32, #tpu.memory_space<any>>
    %c2_i32_42 = arith.constant 2 : i32
    %c0_i32_43 = arith.constant 0 : i32
    %77 = tpu.memref_slice %arg6[%c2_i32_42, %c0_i32_43] : memref<8x32xf32, #tpu.memory_space<vmem>> -> memref<1x32xf32, #tpu.memory_space<vmem>>
    %78 = tpu.memref_slice %arg7[%c2_i32_40] : memref<8x!tpu.dma_semaphore, #tpu.memory_space<semaphore_mem>> -> memref<1x!tpu.dma_semaphore, #tpu.memory_space<semaphore_mem>>
    %79 = tpu.memref_squeeze %78 : memref<1x!tpu.dma_semaphore, #tpu.memory_space<semaphore_mem>> -> memref<!tpu.dma_semaphore, #tpu.memory_space<semaphore_mem>>
    tpu.wait_dma2 semaphore(%79 : memref<!tpu.dma_semaphore, #tpu.memory_space<semaphore_mem>>) src(%76 : memref<1x32xf32, #tpu.memory_space<any>>) dst(%77 : memref<1x32xf32, #tpu.memory_space<vmem>>)
    %c3_i32_44 = arith.constant 3 : i32
    %c0_i32_45 = arith.constant 0 : i32
    %80 = tpu.memref_slice %arg3[%28, %c0_i32_45] : memref<50x32xf32, #tpu.memory_space<any>> -> memref<1x32xf32, #tpu.memory_space<any>>
    %c3_i32_46 = arith.constant 3 : i32
    %c0_i32_47 = arith.constant 0 : i32
    %81 = tpu.memref_slice %arg6[%c3_i32_46, %c0_i32_47] : memref<8x32xf32, #tpu.memory_space<vmem>> -> memref<1x32xf32, #tpu.memory_space<vmem>>
    %82 = tpu.memref_slice %arg7[%c3_i32_44] : memref<8x!tpu.dma_semaphore, #tpu.memory_space<semaphore_mem>> -> memref<1x!tpu.dma_semaphore, #tpu.memory_space<semaphore_mem>>
    %83 = tpu.memref_squeeze %82 : memref<1x!tpu.dma_semaphore, #tpu.memory_space<semaphore_mem>> -> memref<!tpu.dma_semaphore, #tpu.memory_space<semaphore_mem>>
    tpu.wait_dma2 semaphore(%83 : memref<!tpu.dma_semaphore, #tpu.memory_space<semaphore_mem>>) src(%80 : memref<1x32xf32, #tpu.memory_space<any>>) dst(%81 : memref<1x32xf32, #tpu.memory_space<vmem>>)
    %c4_i32_48 = arith.constant 4 : i32
    %c0_i32_49 = arith.constant 0 : i32
    %84 = tpu.memref_slice %arg3[%36, %c0_i32_49] : memref<50x32xf32, #tpu.memory_space<any>> -> memref<1x32xf32, #tpu.memory_space<any>>
    %c4_i32_50 = arith.constant 4 : i32
    %c0_i32_51 = arith.constant 0 : i32
    %85 = tpu.memref_slice %arg6[%c4_i32_50, %c0_i32_51] : memref<8x32xf32, #tpu.memory_space<vmem>> -> memref<1x32xf32, #tpu.memory_space<vmem>>
    %86 = tpu.memref_slice %arg7[%c4_i32_48] : memref<8x!tpu.dma_semaphore, #tpu.memory_space<semaphore_mem>> -> memref<1x!tpu.dma_semaphore, #tpu.memory_space<semaphore_mem>>
    %87 = tpu.memref_squeeze %86 : memref<1x!tpu.dma_semaphore, #tpu.memory_space<semaphore_mem>> -> memref<!tpu.dma_semaphore, #tpu.memory_space<semaphore_mem>>
    tpu.wait_dma2 semaphore(%87 : memref<!tpu.dma_semaphore, #tpu.memory_space<semaphore_mem>>) src(%84 : memref<1x32xf32, #tpu.memory_space<any>>) dst(%85 : memref<1x32xf32, #tpu.memory_space<vmem>>)
    %c5_i32_52 = arith.constant 5 : i32
    %c0_i32_53 = arith.constant 0 : i32
    %88 = tpu.memref_slice %arg3[%44, %c0_i32_53] : memref<50x32xf32, #tpu.memory_space<any>> -> memref<1x32xf32, #tpu.memory_space<any>>
    %c5_i32_54 = arith.constant 5 : i32
    %c0_i32_55 = arith.constant 0 : i32
    %89 = tpu.memref_slice %arg6[%c5_i32_54, %c0_i32_55] : memref<8x32xf32, #tpu.memory_space<vmem>> -> memref<1x32xf32, #tpu.memory_space<vmem>>
    %90 = tpu.memref_slice %arg7[%c5_i32_52] : memref<8x!tpu.dma_semaphore, #tpu.memory_space<semaphore_mem>> -> memref<1x!tpu.dma_semaphore, #tpu.memory_space<semaphore_mem>>
    %91 = tpu.memref_squeeze %90 : memref<1x!tpu.dma_semaphore, #tpu.memory_space<semaphore_mem>> -> memref<!tpu.dma_semaphore, #tpu.memory_space<semaphore_mem>>
    tpu.wait_dma2 semaphore(%91 : memref<!tpu.dma_semaphore, #tpu.memory_space<semaphore_mem>>) src(%88 : memref<1x32xf32, #tpu.memory_space<any>>) dst(%89 : memref<1x32xf32, #tpu.memory_space<vmem>>)
    %c6_i32_56 = arith.constant 6 : i32
    %c0_i32_57 = arith.constant 0 : i32
    %92 = tpu.memref_slice %arg3[%52, %c0_i32_57] : memref<50x32xf32, #tpu.memory_space<any>> -> memref<1x32xf32, #tpu.memory_space<any>>
    %c6_i32_58 = arith.constant 6 : i32
    %c0_i32_59 = arith.constant 0 : i32
    %93 = tpu.memref_slice %arg6[%c6_i32_58, %c0_i32_59] : memref<8x32xf32, #tpu.memory_space<vmem>> -> memref<1x32xf32, #tpu.memory_space<vmem>>
    %94 = tpu.memref_slice %arg7[%c6_i32_56] : memref<8x!tpu.dma_semaphore, #tpu.memory_space<semaphore_mem>> -> memref<1x!tpu.dma_semaphore, #tpu.memory_space<semaphore_mem>>
    %95 = tpu.memref_squeeze %94 : memref<1x!tpu.dma_semaphore, #tpu.memory_space<semaphore_mem>> -> memref<!tpu.dma_semaphore, #tpu.memory_space<semaphore_mem>>
    tpu.wait_dma2 semaphore(%95 : memref<!tpu.dma_semaphore, #tpu.memory_space<semaphore_mem>>) src(%92 : memref<1x32xf32, #tpu.memory_space<any>>) dst(%93 : memref<1x32xf32, #tpu.memory_space<vmem>>)
    %c7_i32_60 = arith.constant 7 : i32
    %c0_i32_61 = arith.constant 0 : i32
    %96 = tpu.memref_slice %arg3[%60, %c0_i32_61] : memref<50x32xf32, #tpu.memory_space<any>> -> memref<1x32xf32, #tpu.memory_space<any>>
    %c7_i32_62 = arith.constant 7 : i32
    %c0_i32_63 = arith.constant 0 : i32
    %97 = tpu.memref_slice %arg6[%c7_i32_62, %c0_i32_63] : memref<8x32xf32, #tpu.memory_space<vmem>> -> memref<1x32xf32, #tpu.memory_space<vmem>>
    %98 = tpu.memref_slice %arg7[%c7_i32_60] : memref<8x!tpu.dma_semaphore, #tpu.memory_space<semaphore_mem>> -> memref<1x!tpu.dma_semaphore, #tpu.memory_space<semaphore_mem>>
    %99 = tpu.memref_squeeze %98 : memref<1x!tpu.dma_semaphore, #tpu.memory_space<semaphore_mem>> -> memref<!tpu.dma_semaphore, #tpu.memory_space<semaphore_mem>>
    tpu.wait_dma2 semaphore(%99 : memref<!tpu.dma_semaphore, #tpu.memory_space<semaphore_mem>>) src(%96 : memref<1x32xf32, #tpu.memory_space<any>>) dst(%97 : memref<1x32xf32, #tpu.memory_space<vmem>>)
    %c0_64 = arith.constant 0 : index
    %c0_65 = arith.constant 0 : index
    %100 = vector.load %arg6[%c0_64, %c0_65] : memref<8x32xf32, #tpu.memory_space<vmem>>, vector<8x32xf32>
    %101 = arith.addf %100, %67 : vector<8x32xf32>
    %102 = vector.shape_cast %101 : vector<8x32xf32> to vector<1x8x32xf32>
    %c0_66 = arith.constant 0 : index
    %c0_67 = arith.constant 0 : index
    %c0_68 = arith.constant 0 : index
    %103 = vector.load %arg5[%c0_66, %c0_67, %c0_68] : memref<1x8x32xf32, #tpu.memory_space<vmem>>, vector<1x8x32xf32>
    tpu.vector_store %arg5[%c0_66, %c0_67, %c0_68], %102 {strides = array<i32>} : memref<1x8x32xf32, #tpu.memory_space<vmem>>, vector<1x8x32xf32>,
    return
  }
  func.func @transform_1(%arg0: i32, %arg1: i32, %arg2: memref<2x8xi32, #tpu.memory_space<smem>>) -> (i32, i32) {
    %c0_i32 = arith.constant 0 : i32
    %c0_i32_0 = arith.constant 0 : i32
    %c0_i32_1 = arith.constant 0 : i32
    return %c0_i32, %c0_i32_0 : i32, i32
  }
  func.func @transform_2(%arg0: i32, %arg1: i32, %arg2: memref<2x8xi32, #tpu.memory_space<smem>>) -> (i32, i32, i32) {
    %c0_i32 = arith.constant 0 : i32
    %c0_i32_0 = arith.constant 0 : i32
    return %arg0, %arg1, %c0_i32 : i32, i32, i32
  }
}

</mosaic_0001>

<llo_original>
// kernel: tpu_custom_call.1
$region0: #{tpu_custom_call.1}
  #allocation0 [shape = 'u32[]', space=smem, size = 0x4, offset = 0x4, fixed_abs, tag = 'smem constant byte address 0x4 - core index']
  #allocation1 [shape = 'u32[72,128]{1,0:T(1,128)}', space=vmem, size = 0x9000, scoped, tag = 'internal scratch']
  #allocation2 [shape = 'f32[8,32]{1,0:T(8,128)}', space=vmem, size = 0x1000, scoped, tag = 'scratch operand']
  #allocation3 [shape = 's32[8]{0}', space=sflag, size = 0x20, scoped, tag = 'scratch operand']
  #allocation4 [shape = 's32[1]{0}', space=sflag, size = 0x4, scoped, tag = 'scoped memory for tpu_custom_call.1']
  #allocation5 [shape = 'u8[1024]{0}', space=smem, size = 0x400, scoped, tag = 'prefetched SMEM operand 0']
  #allocation8 [shape = 's32[]', space=sflag, size = 0x4, offset = 0, fixed_abs, tag = 'sflag constant byte address 0x0 - dummy sync flag']
  #allocation9 [shape = 's32[]', space=sflag, size = 0x4, offset = 0, fixed_abs, tag = 'sflag constant byte address 0x0 - dummy sync flag']
  #allocation10 [shape = 's32[]', space=sflag, size = 0x4, offset = 0, fixed_abs, tag = 'sflag constant byte address 0x0 - dummy sync flag']
  #allocation11 [shape = 's32[]', space=sflag, size = 0x4, offset = 0, fixed_abs, tag = 'sflag constant byte address 0x0 - dummy sync flag']
  #allocation12 [shape = 's32[]', space=sflag, size = 0x4, offset = 0, fixed_abs, tag = 'sflag constant byte address 0x0 - dummy sync flag']
  #allocation13 [shape = 's32[]', space=sflag, size = 0x4, offset = 0, fixed_abs, tag = 'sflag constant byte address 0x0 - dummy sync flag']
  #allocation14 [shape = 's32[]', space=sflag, size = 0x4, offset = 0, fixed_abs, tag = 'sflag constant byte address 0x0 - dummy sync flag']
  #allocation15 [shape = 's32[]', space=sflag, size = 0x4, offset = 0, fixed_abs, tag = 'sflag constant byte address 0x0 - dummy sync flag']
  %s0 = inlined_call_operand.vmem [shape: s32[2,8], index: 0, kind: input, shape index: {}]
  %s1 = inlined_call_operand.vmem [shape: f32[50,32], index: 1, kind: input, shape index: {}]
  %s2 = inlined_call_operand.vmem [shape: f32[8,32], index: 2, kind: input, shape index: {}]
  %s3 = inlined_call_operand.hbm [shape: f32[2,8,32], index: 3, kind: output, shape index: {}]
  %s4 = sld [smem:[#allocation0]]
  $region277: #{tpu_custom_call.1} parent=0
    _
  %s6 = ssub.s32 1, %s4
  %s7 = scalar_select 0, %s6, %s4
  %s9 = sshll.u32 %s0, 4
  %s10 = int_to_ptr.vmem [resolvable:$true] %s9
  %12 = dma.vmem_to_smem %s10, 32, [#allocation5], [#allocation4]
  %14 = dma.done [#allocation4], 32
  %15 = sfence
  $region1: #{tpu_custom_call.1} parent=0
    #allocation6 [shape = 'u8[8192]{0}', space=vmem, size = 0x2000, scoped, tag = 'output window, operand 0']
    #allocation7 [shape = 's32[2]{0}', space=sflag, size = 0x8, scoped, tag = 'scoped memory for tpu_custom_call.1']
    %16 = vsyncpa [#allocation7], 0
    %s17 = scalar_lea.sflag [#allocation7], 1
    %18 = vsyncpa %s17, 0
    loop: start=0, step=1, limit=4
    $region2: #{tpu_custom_call.1} parent=1 // loop_pre_header
      _
    $region3: #{tpu_custom_call.1} parent=1 // loop_header
      %s20 = sphi 0, %s24
      %p21 = scmp.ge.s32.totalorder %s20, 4
      %s27 = sphi 0, %s39
      %s28 = sphi 0, %s35
      %s29 = sphi 0, %s27
      %s30 = sphi 0, %s28
      %s31 = sphi 0, %s29
      %s32 = sphi 0, %s30
      %s40 = sphi 0, %s40
      %s42 = sphi 0, %s40
      %s43 = sphi 0, %s42
      %s57 = sphi 0, %s43
      %s65 = sphi 0, %s67
      %s68 = sphi 0, %s65
      %s69 = sphi 0, %s68
      %s85 = sphi 0, %s69
    $region4: #{tpu_custom_call.1} parent=1 // loop_header_branch
      %23 = sbr.rel (%p21) target = $region8
    $region5: #{tpu_custom_call.1} parent=1 // loop_body
      %s25 = ssub.s32 %s20, 1
      %s26 = ssub.s32 %s20, 2
      %s33 = sadd.s32 1, %s28
      %p34 = scmp.ge.s32.totalorder %s33, 1
      %s35 = scalar_select %p34, 0, %s33
      %s36 = sadd.s32 1, %s27
      %s37 = scalar_select %p34, %s36, %s27
      %p38 = scmp.ge.s32.totalorder %s37, 2
      %s39 = scalar_select %p38, 0, %s37
      %s41 = sadd.s32 %s40, 1
      %p44 = scmp.eq.s32.totalorder %s20, 1
      %p45 = scmp.ne.s32.totalorder %s40, %s42
      %p46 = scmp.eq.s32.totalorder %s20, 0
      %p47 = por %p45, %p46
      %p48 = scmp.ne.s32.totalorder %s40, %s42
      %p49 = scmp.eq.s32.totalorder %s25, 1
      %p50 = por %p48, %p49
      %p51 = scmp.ne.s32.totalorder %s42, %s43
      %p52 = scmp.eq.s32.totalorder %s25, 0
      %p53 = por %p51, %p52
      %p54 = scmp.ne.s32.totalorder %s42, %s43
      %p55 = scmp.eq.s32.totalorder %s26, 1
      %p56 = por %p54, %p55
      %p58 = scmp.ne.s32.totalorder %s43, %s57
      %p59 = scmp.eq.s32.totalorder %s26, 0
      %p60 = por %p58, %p59
      %s61 = ssub.s32 %s27, %s39
      %s62 = ssub.s32 %s28, %s35
      %s63 = sor.u32 %s61, %s62
      %p64 = scmp.eq.s32.totalorder %s63, 0
      %s66 = sadd.s32 %s65, 1
      %s67 = scalar_select %p64, %s65, %s66
      %p70 = pneg %p64
      %p71 = scmp.eq.s32.totalorder %s20, 1
      %p72 = por %p70, %p71
      %p73 = scmp.ne.s32.totalorder %s65, %s68
      %p74 = scmp.eq.s32.totalorder %s20, 0
      %p75 = por %p73, %p74
      %p76 = scmp.ne.s32.totalorder %s65, %s68
      %p77 = scmp.eq.s32.totalorder %s25, 1
      %p78 = por %p76, %p77
      %p79 = scmp.ne.s32.totalorder %s68, %s69
      %p80 = scmp.eq.s32.totalorder %s25, 0
      %p81 = por %p79, %p80
      %p82 = scmp.ne.s32.totalorder %s68, %s69
      %p83 = scmp.eq.s32.totalorder %s26, 1
      %p84 = por %p82, %p83
      %p86 = scmp.ne.s32.totalorder %s69, %s85
      %p87 = scmp.eq.s32.totalorder %s26, 0
      %p88 = por %p86, %p87
      %p89 = scmp.le.s32.totalorder 1, %s20
      %p90 = scmp.lt.s32.totalorder %s20, 3
      %p91 = pnand %p89, %p90
      %p92 = pneg %p91
      // Predicated region
      $region9: #{tpu_custom_call.1} parent=5 // pred_check
        _
      $region10: #{tpu_custom_call.1} parent=5 // pred_check_branch
        %94 = sbr.rel (%p91) target = $region12
      $region11: #{tpu_custom_call.1} parent=5 // pred_region
        %s95 = ssub.s32 %s20, 1
        // Predicated region
        $region13: #{tpu_custom_call.1} parent=11 // pred_check
          %p96 = pneg %p53
        $region14: #{tpu_custom_call.1} parent=11 // pred_check_branch
          %98 = sbr.rel (%p96) target = $region16
        $region15: #{tpu_custom_call.1} parent=11 // pred_region
          _
        $region16: #{tpu_custom_call.1} parent=11 // pred_fallthru
          _
      $region12: #{tpu_custom_call.1} parent=5 // pred_fallthru
        _
      %p99 = scmp.lt.s32.totalorder %s20, 2
      // Predicated region
      $region17: #{tpu_custom_call.1} parent=5 // pred_check
        %p100 = pneg %p99
      $region18: #{tpu_custom_call.1} parent=5 // pred_check_branch
        %102 = sbr.rel (%p100) target = $region20
      $region19: #{tpu_custom_call.1} parent=5 // pred_region
        _
      $region20: #{tpu_custom_call.1} parent=5 // pred_fallthru
        _
      %p103 = scmp.le.s32.totalorder 1, %s20
      %p104 = scmp.lt.s32.totalorder %s20, 3
      %p105 = pnand %p103, %p104
      %p106 = pneg %p105
      // Predicated region
      $region21: #{tpu_custom_call.1} parent=5 // pred_check
        _
      $region22: #{tpu_custom_call.1} parent=5 // pred_check_branch
        %108 = sbr.rel (%p105) target = $region24
      $region23: #{tpu_custom_call.1} parent=5 // pred_region
        %s109 = ssub.s32 %s20, 1
        %p110 = pneg %p53
        %p111 = pneg %p50
        %p112 = pneg %p81
        %p113 = pneg %p78
        %s114 = sand.u32 %s68, 1
        %s115 = scalar_lea.sflag [#allocation7], %s114
        %s116 = sand.u32 %s68, 1
        %s117 = smul.addr %s116, 8
        %s118 = scalar_lea.vmem [#allocation6], %s117
        %s119 = smul.u32 %s30, 8
        %s120 = sshra.s32 %s119, 7
        %s121 = sand.u32 %s119, 127
        %s122 = sadd.s32 %s120, %s29
        %s123 = smul.u32 %s122, 128
        %s124 = sshra.s32 %s119, 7
        %s125 = sand.u32 %s119, 127
        %s126 = sadd.s32 %s123, %s125
        %s127 = sld [smem:[#allocation5 + %s126]]
        %s128 = scalar_lea.vmem %s1, %s127
        // Predicated region
        $region25: #{tpu_custom_call.1} parent=23 // pred_check
          _
        $region26: #{tpu_custom_call.1} parent=23 // pred_check_branch
          %130 = sbr.rel target = $region28
        $region27: #{tpu_custom_call.1} parent=23 // pred_region
          // Predicated region
          $region40: #{tpu_custom_call.1} parent=27 // pred_check
            _
          $region41: #{tpu_custom_call.1} parent=27 // pred_check_branch
            %146 = sbr.rel (0) target = $region43
          $region42: #{tpu_custom_call.1} parent=27 // pred_region
            %s148 = ssub.s32 2, 1
            loop: start=0, step=1, limit=1
            $region44: #{tpu_custom_call.1} parent=42 // loop_pre_header
              _
            $region45: #{tpu_custom_call.1} parent=42 // loop_header
              %s150 = sphi 0, %s154
              %p151 = scmp.ge.s32.totalorder %s150, 1
              %s155 = sphi %s128, %s128
              %s156 = sphi [#allocation2], [#allocation2]
            $region46: #{tpu_custom_call.1} parent=42 // loop_header_branch
              %153 = sbr.rel (%p151) target = $region50
            $region47: #{tpu_custom_call.1} parent=42 // loop_body
              %v157 = vld [vmem:[%s155] sm:%s148]
              %158 = vst [vmem:[%s156] sm:%s148] %v157
            $region48: #{tpu_custom_call.1} parent=42 // loop_footer
              %s154 = sadd.s32 1, %s150
            $region49: #{tpu_custom_call.1} parent=42 // loop_footer_branch
              %149 = sbr.rel target = $region45
            $region50: #{tpu_custom_call.1} parent=42 // loop_exit
              _
          $region43: #{tpu_custom_call.1} parent=27 // pred_fallthru
            _
        $region28: #{tpu_custom_call.1} parent=23 // pred_fallthru
          _
        // Predicated region
        $region29: #{tpu_custom_call.1} parent=23 // pred_check
          _
        $region30: #{tpu_custom_call.1} parent=23 // pred_check_branch
          %132 = sbr.rel (0) target = $region32
        $region31: #{tpu_custom_call.1} parent=23 // pred_region
          %s134 = ssub.s32 2, 1
          loop: start=0, step=1, limit=1
          $region33: #{tpu_custom_call.1} parent=31 // loop_pre_header
            _
          $region34: #{tpu_custom_call.1} parent=31 // loop_header
            %s136 = sphi 0, %s140
            %p137 = scmp.ge.s32.totalorder %s136, 1
            %s141 = sphi %s128, %s128
            %s142 = sphi [#allocation2], [#allocation2]
          $region35: #{tpu_custom_call.1} parent=31 // loop_header_branch
            %139 = sbr.rel (%p137) target = $region39
          $region36: #{tpu_custom_call.1} parent=31 // loop_body
            %v143 = vld [vmem:[%s141] sm:%s134]
            %144 = vst [vmem:[%s142] sm:%s134] %v143
          $region37: #{tpu_custom_call.1} parent=31 // loop_footer
            %s140 = sadd.s32 1, %s136
          $region38: #{tpu_custom_call.1} parent=31 // loop_footer_branch
            %135 = sbr.rel target = $region34
          $region39: #{tpu_custom_call.1} parent=31 // loop_exit
            _
        $region32: #{tpu_custom_call.1} parent=23 // pred_fallthru
          _
        // Predicated region
        $region51: #{tpu_custom_call.1} parent=23 // pred_check
          _
        $region52: #{tpu_custom_call.1} parent=23 // pred_check_branch
          %161 = sbr.rel (0) target = $region54
        $region53: #{tpu_custom_call.1} parent=23 // pred_region
          %162 = vsyncadd [#allocation3], 16
        $region54: #{tpu_custom_call.1} parent=23 // pred_fallthru
          _
        %s163 = sadd.s32 %s119, 1
        %s164 = sshra.s32 %s163, 7
        %s165 = sand.u32 %s163, 127
        %s166 = sadd.s32 %s164, %s29
        %s167 = smul.u32 %s166, 128
        %s168 = sshra.s32 %s163, 7
        %s169 = sand.u32 %s163, 127
        %s170 = sadd.s32 %s167, %s169
        %s171 = sld [smem:[#allocation5 + %s170]]
        %s172 = scalar_lea.vmem %s1, %s171
        %s173 = scalar_lea.vmem [#allocation2], 1
        %s174 = scalar_lea.sflag [#allocation3], 1
        // Predicated region
        $region55: #{tpu_custom_call.1} parent=23 // pred_check
          _
        $region56: #{tpu_custom_call.1} parent=23 // pred_check_branch
          %176 = sbr.rel target = $region58
        $region57: #{tpu_custom_call.1} parent=23 // pred_region
          // Predicated region
          $region70: #{tpu_custom_call.1} parent=57 // pred_check
            _
          $region71: #{tpu_custom_call.1} parent=57 // pred_check_branch
            %192 = sbr.rel (0) target = $region73
          $region72: #{tpu_custom_call.1} parent=57 // pred_region
            %s194 = ssub.s32 2, 1
            loop: start=0, step=1, limit=1
            $region74: #{tpu_custom_call.1} parent=72 // loop_pre_header
              _
            $region75: #{tpu_custom_call.1} parent=72 // loop_header
              %s196 = sphi 0, %s200
              %p197 = scmp.ge.s32.totalorder %s196, 1
              %s201 = sphi %s172, %s172
              %s202 = sphi %s173, %s173
            $region76: #{tpu_custom_call.1} parent=72 // loop_header_branch
              %199 = sbr.rel (%p197) target = $region80
            $region77: #{tpu_custom_call.1} parent=72 // loop_body
              %v203 = vld [vmem:[%s201] sm:%s194]
              %204 = vst [vmem:[%s202] sm:%s194] %v203
            $region78: #{tpu_custom_call.1} parent=72 // loop_footer
              %s200 = sadd.s32 1, %s196
            $region79: #{tpu_custom_call.1} parent=72 // loop_footer_branch
              %195 = sbr.rel target = $region75
            $region80: #{tpu_custom_call.1} parent=72 // loop_exit
              _
          $region73: #{tpu_custom_call.1} parent=57 // pred_fallthru
            _
        $region58: #{tpu_custom_call.1} parent=23 // pred_fallthru
          _
        // Predicated region
        $region59: #{tpu_custom_call.1} parent=23 // pred_check
          _
        $region60: #{tpu_custom_call.1} parent=23 // pred_check_branch
          %178 = sbr.rel (0) target = $region62
        $region61: #{tpu_custom_call.1} parent=23 // pred_region
          %s180 = ssub.s32 2, 1
          loop: start=0, step=1, limit=1
          $region63: #{tpu_custom_call.1} parent=61 // loop_pre_header
            _
          $region64: #{tpu_custom_call.1} parent=61 // loop_header
            %s182 = sphi 0, %s186
            %p183 = scmp.ge.s32.totalorder %s182, 1
            %s187 = sphi %s172, %s172
            %s188 = sphi %s173, %s173
          $region65: #{tpu_custom_call.1} parent=61 // loop_header_branch
            %185 = sbr.rel (%p183) target = $region69
          $region66: #{tpu_custom_call.1} parent=61 // loop_body
            %v189 = vld [vmem:[%s187] sm:%s180]
            %190 = vst [vmem:[%s188] sm:%s180] %v189
          $region67: #{tpu_custom_call.1} parent=61 // loop_footer
            %s186 = sadd.s32 1, %s182
          $region68: #{tpu_custom_call.1} parent=61 // loop_footer_branch
            %181 = sbr.rel target = $region64
          $region69: #{tpu_custom_call.1} parent=61 // loop_exit
            _
        $region62: #{tpu_custom_call.1} parent=23 // pred_fallthru
          _
        // Predicated region
        $region81: #{tpu_custom_call.1} parent=23 // pred_check
          _
        $region82: #{tpu_custom_call.1} parent=23 // pred_check_branch
          %207 = sbr.rel (0) target = $region84
        $region83: #{tpu_custom_call.1} parent=23 // pred_region
          %208 = vsyncadd %s174, 16
        $region84: #{tpu_custom_call.1} parent=23 // pred_fallthru
          _
        %s209 = sadd.s32 %s119, 2
        %s210 = sshra.s32 %s209, 7
        %s211 = sand.u32 %s209, 127
        %s212 = sadd.s32 %s210, %s29
        %s213 = smul.u32 %s212, 128
        %s214 = sshra.s32 %s209, 7
        %s215 = sand.u32 %s209, 127
        %s216 = sadd.s32 %s213, %s215
        %s217 = sld [smem:[#allocation5 + %s216]]
        %s218 = scalar_lea.vmem %s1, %s217
        %s219 = scalar_lea.vmem [#allocation2], 2
        %s220 = scalar_lea.sflag [#allocation3], 2
        // Predicated region
        $region85: #{tpu_custom_call.1} parent=23 // pred_check
          _
        $region86: #{tpu_custom_call.1} parent=23 // pred_check_branch
          %222 = sbr.rel target = $region88
        $region87: #{tpu_custom_call.1} parent=23 // pred_region
          // Predicated region
          $region100: #{tpu_custom_call.1} parent=87 // pred_check
            _
          $region101: #{tpu_custom_call.1} parent=87 // pred_check_branch
            %238 = sbr.rel (0) target = $region103
          $region102: #{tpu_custom_call.1} parent=87 // pred_region
            %s240 = ssub.s32 2, 1
            loop: start=0, step=1, limit=1
            $region104: #{tpu_custom_call.1} parent=102 // loop_pre_header
              _
            $region105: #{tpu_custom_call.1} parent=102 // loop_header
              %s242 = sphi 0, %s246
              %p243 = scmp.ge.s32.totalorder %s242, 1
              %s247 = sphi %s218, %s218
              %s248 = sphi %s219, %s219
            $region106: #{tpu_custom_call.1} parent=102 // loop_header_branch
              %245 = sbr.rel (%p243) target = $region110
            $region107: #{tpu_custom_call.1} parent=102 // loop_body
              %v249 = vld [vmem:[%s247] sm:%s240]
              %250 = vst [vmem:[%s248] sm:%s240] %v249
            $region108: #{tpu_custom_call.1} parent=102 // loop_footer
              %s246 = sadd.s32 1, %s242
            $region109: #{tpu_custom_call.1} parent=102 // loop_footer_branch
              %241 = sbr.rel target = $region105
            $region110: #{tpu_custom_call.1} parent=102 // loop_exit
              _
          $region103: #{tpu_custom_call.1} parent=87 // pred_fallthru
            _
        $region88: #{tpu_custom_call.1} parent=23 // pred_fallthru
          _
        // Predicated region
        $region89: #{tpu_custom_call.1} parent=23 // pred_check
          _
        $region90: #{tpu_custom_call.1} parent=23 // pred_check_branch
          %224 = sbr.rel (0) target = $region92
        $region91: #{tpu_custom_call.1} parent=23 // pred_region
          %s226 = ssub.s32 2, 1
          loop: start=0, step=1, limit=1
          $region93: #{tpu_custom_call.1} parent=91 // loop_pre_header
            _
          $region94: #{tpu_custom_call.1} parent=91 // loop_header
            %s228 = sphi 0, %s232
            %p229 = scmp.ge.s32.totalorder %s228, 1
            %s233 = sphi %s218, %s218
            %s234 = sphi %s219, %s219
          $region95: #{tpu_custom_call.1} parent=91 // loop_header_branch
            %231 = sbr.rel (%p229) target = $region99
          $region96: #{tpu_custom_call.1} parent=91 // loop_body
            %v235 = vld [vmem:[%s233] sm:%s226]
            %236 = vst [vmem:[%s234] sm:%s226] %v235
          $region97: #{tpu_custom_call.1} parent=91 // loop_footer
            %s232 = sadd.s32 1, %s228
          $region98: #{tpu_custom_call.1} parent=91 // loop_footer_branch
            %227 = sbr.rel target = $region94
          $region99: #{tpu_custom_call.1} parent=91 // loop_exit
            _
        $region92: #{tpu_custom_call.1} parent=23 // pred_fallthru
          _
        // Predicated region
        $region111: #{tpu_custom_call.1} parent=23 // pred_check
          _
        $region112: #{tpu_custom_call.1} parent=23 // pred_check_branch
          %253 = sbr.rel (0) target = $region114
        $region113: #{tpu_custom_call.1} parent=23 // pred_region
          %254 = vsyncadd %s220, 16
        $region114: #{tpu_custom_call.1} parent=23 // pred_fallthru
          _
        %s255 = sadd.s32 %s119, 3
        %s256 = sshra.s32 %s255, 7
        %s257 = sand.u32 %s255, 127
        %s258 = sadd.s32 %s256, %s29
        %s259 = smul.u32 %s258, 128
        %s260 = sshra.s32 %s255, 7
        %s261 = sand.u32 %s255, 127
        %s262 = sadd.s32 %s259, %s261
        %s263 = sld [smem:[#allocation5 + %s262]]
        %s264 = scalar_lea.vmem %s1, %s263
        %s265 = scalar_lea.vmem [#allocation2], 3
        %s266 = scalar_lea.sflag [#allocation3], 3
        // Predicated region
        $region115: #{tpu_custom_call.1} parent=23 // pred_check
          _
        $region116: #{tpu_custom_call.1} parent=23 // pred_check_branch
          %268 = sbr.rel target = $region118
        $region117: #{tpu_custom_call.1} parent=23 // pred_region
          // Predicated region
          $region130: #{tpu_custom_call.1} parent=117 // pred_check
            _
          $region131: #{tpu_custom_call.1} parent=117 // pred_check_branch
            %284 = sbr.rel (0) target = $region133
          $region132: #{tpu_custom_call.1} parent=117 // pred_region
            %s286 = ssub.s32 2, 1
            loop: start=0, step=1, limit=1
            $region134: #{tpu_custom_call.1} parent=132 // loop_pre_header
              _
            $region135: #{tpu_custom_call.1} parent=132 // loop_header
              %s288 = sphi 0, %s292
              %p289 = scmp.ge.s32.totalorder %s288, 1
              %s293 = sphi %s264, %s264
              %s294 = sphi %s265, %s265
            $region136: #{tpu_custom_call.1} parent=132 // loop_header_branch
              %291 = sbr.rel (%p289) target = $region140
            $region137: #{tpu_custom_call.1} parent=132 // loop_body
              %v295 = vld [vmem:[%s293] sm:%s286]
              %296 = vst [vmem:[%s294] sm:%s286] %v295
            $region138: #{tpu_custom_call.1} parent=132 // loop_footer
              %s292 = sadd.s32 1, %s288
            $region139: #{tpu_custom_call.1} parent=132 // loop_footer_branch
              %287 = sbr.rel target = $region135
            $region140: #{tpu_custom_call.1} parent=132 // loop_exit
              _
          $region133: #{tpu_custom_call.1} parent=117 // pred_fallthru
            _
        $region118: #{tpu_custom_call.1} parent=23 // pred_fallthru
          _
        // Predicated region
        $region119: #{tpu_custom_call.1} parent=23 // pred_check
          _
        $region120: #{tpu_custom_call.1} parent=23 // pred_check_branch
          %270 = sbr.rel (0) target = $region122
        $region121: #{tpu_custom_call.1} parent=23 // pred_region
          %s272 = ssub.s32 2, 1
          loop: start=0, step=1, limit=1
          $region123: #{tpu_custom_call.1} parent=121 // loop_pre_header
            _
          $region124: #{tpu_custom_call.1} parent=121 // loop_header
            %s274 = sphi 0, %s278
            %p275 = scmp.ge.s32.totalorder %s274, 1
            %s279 = sphi %s264, %s264
            %s280 = sphi %s265, %s265
          $region125: #{tpu_custom_call.1} parent=121 // loop_header_branch
            %277 = sbr.rel (%p275) target = $region129
          $region126: #{tpu_custom_call.1} parent=121 // loop_body
            %v281 = vld [vmem:[%s279] sm:%s272]
            %282 = vst [vmem:[%s280] sm:%s272] %v281
          $region127: #{tpu_custom_call.1} parent=121 // loop_footer
            %s278 = sadd.s32 1, %s274
          $region128: #{tpu_custom_call.1} parent=121 // loop_footer_branch
            %273 = sbr.rel target = $region124
          $region129: #{tpu_custom_call.1} parent=121 // loop_exit
            _
        $region122: #{tpu_custom_call.1} parent=23 // pred_fallthru
          _
        // Predicated region
        $region141: #{tpu_custom_call.1} parent=23 // pred_check
          _
        $region142: #{tpu_custom_call.1} parent=23 // pred_check_branch
          %299 = sbr.rel (0) target = $region144
        $region143: #{tpu_custom_call.1} parent=23 // pred_region
          %300 = vsyncadd %s266, 16
        $region144: #{tpu_custom_call.1} parent=23 // pred_fallthru
          _
        %s301 = sadd.s32 %s119, 4
        %s302 = sshra.s32 %s301, 7
        %s303 = sand.u32 %s301, 127
        %s304 = sadd.s32 %s302, %s29
        %s305 = smul.u32 %s304, 128
        %s306 = sshra.s32 %s301, 7
        %s307 = sand.u32 %s301, 127
        %s308 = sadd.s32 %s305, %s307
        %s309 = sld [smem:[#allocation5 + %s308]]
        %s310 = scalar_lea.vmem %s1, %s309
        %s311 = scalar_lea.vmem [#allocation2], 4
        %s312 = scalar_lea.sflag [#allocation3], 4
        // Predicated region
        $region145: #{tpu_custom_call.1} parent=23 // pred_check
          _
        $region146: #{tpu_custom_call.1} parent=23 // pred_check_branch
          %314 = sbr.rel target = $region148
        $region147: #{tpu_custom_call.1} parent=23 // pred_region
          // Predicated region
          $region160: #{tpu_custom_call.1} parent=147 // pred_check
            _
          $region161: #{tpu_custom_call.1} parent=147 // pred_check_branch
            %330 = sbr.rel (0) target = $region163
          $region162: #{tpu_custom_call.1} parent=147 // pred_region
            %s332 = ssub.s32 2, 1
            loop: start=0, step=1, limit=1
            $region164: #{tpu_custom_call.1} parent=162 // loop_pre_header
              _
            $region165: #{tpu_custom_call.1} parent=162 // loop_header
              %s334 = sphi 0, %s338
              %p335 = scmp.ge.s32.totalorder %s334, 1
              %s339 = sphi %s310, %s310
              %s340 = sphi %s311, %s311
            $region166: #{tpu_custom_call.1} parent=162 // loop_header_branch
              %337 = sbr.rel (%p335) target = $region170
            $region167: #{tpu_custom_call.1} parent=162 // loop_body
              %v341 = vld [vmem:[%s339] sm:%s332]
              %342 = vst [vmem:[%s340] sm:%s332] %v341
            $region168: #{tpu_custom_call.1} parent=162 // loop_footer
              %s338 = sadd.s32 1, %s334
            $region169: #{tpu_custom_call.1} parent=162 // loop_footer_branch
              %333 = sbr.rel target = $region165
            $region170: #{tpu_custom_call.1} parent=162 // loop_exit
              _
          $region163: #{tpu_custom_call.1} parent=147 // pred_fallthru
            _
        $region148: #{tpu_custom_call.1} parent=23 // pred_fallthru
          _
        // Predicated region
        $region149: #{tpu_custom_call.1} parent=23 // pred_check
          _
        $region150: #{tpu_custom_call.1} parent=23 // pred_check_branch
          %316 = sbr.rel (0) target = $region152
        $region151: #{tpu_custom_call.1} parent=23 // pred_region
          %s318 = ssub.s32 2, 1
          loop: start=0, step=1, limit=1
          $region153: #{tpu_custom_call.1} parent=151 // loop_pre_header
            _
          $region154: #{tpu_custom_call.1} parent=151 // loop_header
            %s320 = sphi 0, %s324
            %p321 = scmp.ge.s32.totalorder %s320, 1
            %s325 = sphi %s310, %s310
            %s326 = sphi %s311, %s311
          $region155: #{tpu_custom_call.1} parent=151 // loop_header_branch
            %323 = sbr.rel (%p321) target = $region159
          $region156: #{tpu_custom_call.1} parent=151 // loop_body
            %v327 = vld [vmem:[%s325] sm:%s318]
            %328 = vst [vmem:[%s326] sm:%s318] %v327
          $region157: #{tpu_custom_call.1} parent=151 // loop_footer
            %s324 = sadd.s32 1, %s320
          $region158: #{tpu_custom_call.1} parent=151 // loop_footer_branch
            %319 = sbr.rel target = $region154
          $region159: #{tpu_custom_call.1} parent=151 // loop_exit
            _
        $region152: #{tpu_custom_call.1} parent=23 // pred_fallthru
          _
        // Predicated region
        $region171: #{tpu_custom_call.1} parent=23 // pred_check
          _
        $region172: #{tpu_custom_call.1} parent=23 // pred_check_branch
          %345 = sbr.rel (0) target = $region174
        $region173: #{tpu_custom_call.1} parent=23 // pred_region
          %346 = vsyncadd %s312, 16
        $region174: #{tpu_custom_call.1} parent=23 // pred_fallthru
          _
        %s347 = sadd.s32 %s119, 5
        %s348 = sshra.s32 %s347, 7
        %s349 = sand.u32 %s347, 127
        %s350 = sadd.s32 %s348, %s29
        %s351 = smul.u32 %s350, 128
        %s352 = sshra.s32 %s347, 7
        %s353 = sand.u32 %s347, 127
        %s354 = sadd.s32 %s351, %s353
        %s355 = sld [smem:[#allocation5 + %s354]]
        %s356 = scalar_lea.vmem %s1, %s355
        %s357 = scalar_lea.vmem [#allocation2], 5
        %s358 = scalar_lea.sflag [#allocation3], 5
        // Predicated region
        $region175: #{tpu_custom_call.1} parent=23 // pred_check
          _
        $region176: #{tpu_custom_call.1} parent=23 // pred_check_branch
          %360 = sbr.rel target = $region178
        $region177: #{tpu_custom_call.1} parent=23 // pred_region
          // Predicated region
          $region190: #{tpu_custom_call.1} parent=177 // pred_check
            _
          $region191: #{tpu_custom_call.1} parent=177 // pred_check_branch
            %376 = sbr.rel (0) target = $region193
          $region192: #{tpu_custom_call.1} parent=177 // pred_region
            %s378 = ssub.s32 2, 1
            loop: start=0, step=1, limit=1
            $region194: #{tpu_custom_call.1} parent=192 // loop_pre_header
              _
            $region195: #{tpu_custom_call.1} parent=192 // loop_header
              %s380 = sphi 0, %s384
              %p381 = scmp.ge.s32.totalorder %s380, 1
              %s385 = sphi %s356, %s356
              %s386 = sphi %s357, %s357
            $region196: #{tpu_custom_call.1} parent=192 // loop_header_branch
              %383 = sbr.rel (%p381) target = $region200
            $region197: #{tpu_custom_call.1} parent=192 // loop_body
              %v387 = vld [vmem:[%s385] sm:%s378]
              %388 = vst [vmem:[%s386] sm:%s378] %v387
            $region198: #{tpu_custom_call.1} parent=192 // loop_footer
              %s384 = sadd.s32 1, %s380
            $region199: #{tpu_custom_call.1} parent=192 // loop_footer_branch
              %379 = sbr.rel target = $region195
            $region200: #{tpu_custom_call.1} parent=192 // loop_exit
              _
          $region193: #{tpu_custom_call.1} parent=177 // pred_fallthru
            _
        $region178: #{tpu_custom_call.1} parent=23 // pred_fallthru
          _
        // Predicated region
        $region179: #{tpu_custom_call.1} parent=23 // pred_check
          _
        $region180: #{tpu_custom_call.1} parent=23 // pred_check_branch
          %362 = sbr.rel (0) target = $region182
        $region181: #{tpu_custom_call.1} parent=23 // pred_region
          %s364 = ssub.s32 2, 1
          loop: start=0, step=1, limit=1
          $region183: #{tpu_custom_call.1} parent=181 // loop_pre_header
            _
          $region184: #{tpu_custom_call.1} parent=181 // loop_header
            %s366 = sphi 0, %s370
            %p367 = scmp.ge.s32.totalorder %s366, 1
            %s371 = sphi %s356, %s356
            %s372 = sphi %s357, %s357
          $region185: #{tpu_custom_call.1} parent=181 // loop_header_branch
            %369 = sbr.rel (%p367) target = $region189
          $region186: #{tpu_custom_call.1} parent=181 // loop_body
            %v373 = vld [vmem:[%s371] sm:%s364]
            %374 = vst [vmem:[%s372] sm:%s364] %v373
          $region187: #{tpu_custom_call.1} parent=181 // loop_footer
            %s370 = sadd.s32 1, %s366
          $region188: #{tpu_custom_call.1} parent=181 // loop_footer_branch
            %365 = sbr.rel target = $region184
          $region189: #{tpu_custom_call.1} parent=181 // loop_exit
            _
        $region182: #{tpu_custom_call.1} parent=23 // pred_fallthru
          _
        // Predicated region
        $region201: #{tpu_custom_call.1} parent=23 // pred_check
          _
        $region202: #{tpu_custom_call.1} parent=23 // pred_check_branch
          %391 = sbr.rel (0) target = $region204
        $region203: #{tpu_custom_call.1} parent=23 // pred_region
          %392 = vsyncadd %s358, 16
        $region204: #{tpu_custom_call.1} parent=23 // pred_fallthru
          _
        %s393 = sadd.s32 %s119, 6
        %s394 = sshra.s32 %s393, 7
        %s395 = sand.u32 %s393, 127
        %s396 = sadd.s32 %s394, %s29
        %s397 = smul.u32 %s396, 128
        %s398 = sshra.s32 %s393, 7
        %s399 = sand.u32 %s393, 127
        %s400 = sadd.s32 %s397, %s399
        %s401 = sld [smem:[#allocation5 + %s400]]
        %s402 = scalar_lea.vmem %s1, %s401
        %s403 = scalar_lea.vmem [#allocation2], 6
        %s404 = scalar_lea.sflag [#allocation3], 6
        // Predicated region
        $region205: #{tpu_custom_call.1} parent=23 // pred_check
          _
        $region206: #{tpu_custom_call.1} parent=23 // pred_check_branch
          %406 = sbr.rel target = $region208
        $region207: #{tpu_custom_call.1} parent=23 // pred_region
          // Predicated region
          $region220: #{tpu_custom_call.1} parent=207 // pred_check
            _
          $region221: #{tpu_custom_call.1} parent=207 // pred_check_branch
            %422 = sbr.rel (0) target = $region223
          $region222: #{tpu_custom_call.1} parent=207 // pred_region
            %s424 = ssub.s32 2, 1
            loop: start=0, step=1, limit=1
            $region224: #{tpu_custom_call.1} parent=222 // loop_pre_header
              _
            $region225: #{tpu_custom_call.1} parent=222 // loop_header
              %s426 = sphi 0, %s430
              %p427 = scmp.ge.s32.totalorder %s426, 1
              %s431 = sphi %s402, %s402
              %s432 = sphi %s403, %s403
            $region226: #{tpu_custom_call.1} parent=222 // loop_header_branch
              %429 = sbr.rel (%p427) target = $region230
            $region227: #{tpu_custom_call.1} parent=222 // loop_body
              %v433 = vld [vmem:[%s431] sm:%s424]
              %434 = vst [vmem:[%s432] sm:%s424] %v433
            $region228: #{tpu_custom_call.1} parent=222 // loop_footer
              %s430 = sadd.s32 1, %s426
            $region229: #{tpu_custom_call.1} parent=222 // loop_footer_branch
              %425 = sbr.rel target = $region225
            $region230: #{tpu_custom_call.1} parent=222 // loop_exit
              _
          $region223: #{tpu_custom_call.1} parent=207 // pred_fallthru
            _
        $region208: #{tpu_custom_call.1} parent=23 // pred_fallthru
          _
        // Predicated region
        $region209: #{tpu_custom_call.1} parent=23 // pred_check
          _
        $region210: #{tpu_custom_call.1} parent=23 // pred_check_branch
          %408 = sbr.rel (0) target = $region212
        $region211: #{tpu_custom_call.1} parent=23 // pred_region
          %s410 = ssub.s32 2, 1
          loop: start=0, step=1, limit=1
          $region213: #{tpu_custom_call.1} parent=211 // loop_pre_header
            _
          $region214: #{tpu_custom_call.1} parent=211 // loop_header
            %s412 = sphi 0, %s416
            %p413 = scmp.ge.s32.totalorder %s412, 1
            %s417 = sphi %s402, %s402
            %s418 = sphi %s403, %s403
          $region215: #{tpu_custom_call.1} parent=211 // loop_header_branch
            %415 = sbr.rel (%p413) target = $region219
          $region216: #{tpu_custom_call.1} parent=211 // loop_body
            %v419 = vld [vmem:[%s417] sm:%s410]
            %420 = vst [vmem:[%s418] sm:%s410] %v419
          $region217: #{tpu_custom_call.1} parent=211 // loop_footer
            %s416 = sadd.s32 1, %s412
          $region218: #{tpu_custom_call.1} parent=211 // loop_footer_branch
            %411 = sbr.rel target = $region214
          $region219: #{tpu_custom_call.1} parent=211 // loop_exit
            _
        $region212: #{tpu_custom_call.1} parent=23 // pred_fallthru
          _
        // Predicated region
        $region231: #{tpu_custom_call.1} parent=23 // pred_check
          _
        $region232: #{tpu_custom_call.1} parent=23 // pred_check_branch
          %437 = sbr.rel (0) target = $region234
        $region233: #{tpu_custom_call.1} parent=23 // pred_region
          %438 = vsyncadd %s404, 16
        $region234: #{tpu_custom_call.1} parent=23 // pred_fallthru
          _
        %s439 = sadd.s32 %s119, 7
        %s440 = sshra.s32 %s439, 7
        %s441 = sand.u32 %s439, 127
        %s442 = sadd.s32 %s440, %s29
        %s443 = smul.u32 %s442, 128
        %s444 = sshra.s32 %s439, 7
        %s445 = sand.u32 %s439, 127
        %s446 = sadd.s32 %s443, %s445
        %s447 = sld [smem:[#allocation5 + %s446]]
        %s448 = scalar_lea.vmem %s1, %s447
        %s449 = scalar_lea.vmem [#allocation2], 7
        %s450 = scalar_lea.sflag [#allocation3], 7
        // Predicated region
        $region235: #{tpu_custom_call.1} parent=23 // pred_check
          _
        $region236: #{tpu_custom_call.1} parent=23 // pred_check_branch
          %452 = sbr.rel target = $region238
        $region237: #{tpu_custom_call.1} parent=23 // pred_region
          // Predicated region
          $region250: #{tpu_custom_call.1} parent=237 // pred_check
            _
          $region251: #{tpu_custom_call.1} parent=237 // pred_check_branch
            %468 = sbr.rel (0) target = $region253
          $region252: #{tpu_custom_call.1} parent=237 // pred_region
            %s470 = ssub.s32 2, 1
            loop: start=0, step=1, limit=1
            $region254: #{tpu_custom_call.1} parent=252 // loop_pre_header
              _
            $region255: #{tpu_custom_call.1} parent=252 // loop_header
              %s472 = sphi 0, %s476
              %p473 = scmp.ge.s32.totalorder %s472, 1
              %s477 = sphi %s448, %s448
              %s478 = sphi %s449, %s449
            $region256: #{tpu_custom_call.1} parent=252 // loop_header_branch
              %475 = sbr.rel (%p473) target = $region260
            $region257: #{tpu_custom_call.1} parent=252 // loop_body
              %v479 = vld [vmem:[%s477] sm:%s470]
              %480 = vst [vmem:[%s478] sm:%s470] %v479
            $region258: #{tpu_custom_call.1} parent=252 // loop_footer
              %s476 = sadd.s32 1, %s472
            $region259: #{tpu_custom_call.1} parent=252 // loop_footer_branch
              %471 = sbr.rel target = $region255
            $region260: #{tpu_custom_call.1} parent=252 // loop_exit
              _
          $region253: #{tpu_custom_call.1} parent=237 // pred_fallthru
            _
        $region238: #{tpu_custom_call.1} parent=23 // pred_fallthru
          _
        // Predicated region
        $region239: #{tpu_custom_call.1} parent=23 // pred_check
          _
        $region240: #{tpu_custom_call.1} parent=23 // pred_check_branch
          %454 = sbr.rel (0) target = $region242
        $region241: #{tpu_custom_call.1} parent=23 // pred_region
          %s456 = ssub.s32 2, 1
          loop: start=0, step=1, limit=1
          $region243: #{tpu_custom_call.1} parent=241 // loop_pre_header
            _
          $region244: #{tpu_custom_call.1} parent=241 // loop_header
            %s458 = sphi 0, %s462
            %p459 = scmp.ge.s32.totalorder %s458, 1
            %s463 = sphi %s448, %s448
            %s464 = sphi %s449, %s449
          $region245: #{tpu_custom_call.1} parent=241 // loop_header_branch
            %461 = sbr.rel (%p459) target = $region249
          $region246: #{tpu_custom_call.1} parent=241 // loop_body
            %v465 = vld [vmem:[%s463] sm:%s456]
            %466 = vst [vmem:[%s464] sm:%s456] %v465
          $region247: #{tpu_custom_call.1} parent=241 // loop_footer
            %s462 = sadd.s32 1, %s458
          $region248: #{tpu_custom_call.1} parent=241 // loop_footer_branch
            %457 = sbr.rel target = $region244
          $region249: #{tpu_custom_call.1} parent=241 // loop_exit
            _
        $region242: #{tpu_custom_call.1} parent=23 // pred_fallthru
          _
        // Predicated region
        $region261: #{tpu_custom_call.1} parent=23 // pred_check
          _
        $region262: #{tpu_custom_call.1} parent=23 // pred_check_branch
          %483 = sbr.rel (0) target = $region264
        $region263: #{tpu_custom_call.1} parent=23 // pred_region
          %484 = vsyncadd %s450, 16
        $region264: #{tpu_custom_call.1} parent=23 // pred_fallthru
          _
        %s485 = scalar_lea.vmem %s2, %s119
        %v486 = vld [vmem:[%s485] sm:$0xff]
        %s487 = smul.u32 1, 1
        %s488 = sshll.u32 %s487, 4
        %489 = dma.done [#allocation3], %s488
        %s490 = sshll.u32 %s487, 4
        %491 = dma.done %s174, %s490
        %s492 = sshll.u32 %s487, 4
        %493 = dma.done %s220, %s492
        %s494 = sshll.u32 %s487, 4
        %495 = dma.done %s266, %s494
        %s496 = sshll.u32 %s487, 4
        %497 = dma.done %s312, %s496
        %s498 = sshll.u32 %s487, 4
        %499 = dma.done %s358, %s498
        %s500 = sshll.u32 %s487, 4
        %501 = dma.done %s404, %s500
        %s502 = sshll.u32 %s487, 4
        %503 = dma.done %s450, %s502
        %v504 = vld [vmem:[#allocation2] sm:$0xff]
        %v505 = vadd.f32 %v504, %v486
        %vm506 = vcmask 261120
        %507 = vst.msk [vmem:[%s118] sm:$0xff] %vm506, %v505
        %s508 = sand.u32 %s68, 1
        %s509 = scalar_lea.sflag [#allocation7], %s508
        %s510 = sand.u32 %s68, 1
        %s511 = smul.addr %s510, 8
        %s512 = scalar_lea.vmem [#allocation6], %s511
        // Predicated region
        $region265: #{tpu_custom_call.1} parent=23 // pred_check
          %p513 = pneg %p78
        $region266: #{tpu_custom_call.1} parent=23 // pred_check_branch
          %515 = sbr.rel (%p513) target = $region268
        $region267: #{tpu_custom_call.1} parent=23 // pred_region
          %517 = vsyncadd %s509, 0
          %s518 = sadd.s32 %s30, %s29
          %s519 = smul.addr %s518, 8
          %s520 = scalar_lea.hbm %s3, %s519
          %s522 = sshll.u32 %s512, 4
          %s523 = int_to_ptr.vmem [resolvable:$true] %s522
          %s524 = sshll.u32 %s520, 4
          %s525 = int_to_ptr.hbm [resolvable:$true] %s524
          %527 = dma.vmem_to_hbm [thread:$0]  %s523, 128, %s525, %s509
        $region268: #{tpu_custom_call.1} parent=23 // pred_fallthru
          _
      $region24: #{tpu_custom_call.1} parent=5 // pred_fallthru
        _
      %p528 = scmp.le.s32.totalorder 2, %s20
      // Predicated region
      $region269: #{tpu_custom_call.1} parent=5 // pred_check
        %p529 = pneg %p528
      $region270: #{tpu_custom_call.1} parent=5 // pred_check_branch
        %531 = sbr.rel (%p529) target = $region272
      $region271: #{tpu_custom_call.1} parent=5 // pred_region
        %s532 = ssub.s32 %s20, 2
        // Predicated region
        $region273: #{tpu_custom_call.1} parent=271 // pred_check
          %p533 = pneg %p84
        $region274: #{tpu_custom_call.1} parent=271 // pred_check_branch
          %535 = sbr.rel (%p533) target = $region276
        $region275: #{tpu_custom_call.1} parent=271 // pred_region
          %s536 = sand.u32 %s69, 1
          %s537 = scalar_lea.sflag [#allocation7], %s536
          %s538 = sand.u32 %s69, 1
          %s539 = smul.addr %s538, 8
          %s540 = scalar_lea.vmem [#allocation6], %s539
          %542 = dma.done %s537, 128
        $region276: #{tpu_custom_call.1} parent=271 // pred_fallthru
          _
      $region272: #{tpu_custom_call.1} parent=5 // pred_fallthru
        _
    $region6: #{tpu_custom_call.1} parent=1 // loop_footer
      %s24 = sadd.s32 1, %s20
    $region7: #{tpu_custom_call.1} parent=1 // loop_footer_branch
      %19 = sbr.rel target = $region3
    $region8: #{tpu_custom_call.1} parent=1 // loop_exit
      _
    %543 = vsyncpa [#allocation7], 1
    %s544 = scalar_lea.sflag [#allocation7], 1
    %545 = vsyncpa %s544, 1
  %546 = vsyncmov [#allocation3]
  %s547 = vpop.sfrf %546
  %p548 = scmp.eq.s32.totalorder %s547, 0
  %p549 = pneg %p548
  %551 = shalt.err (%p549)
  %s552 = scalar_lea.sflag [#allocation3], 1
  %553 = vsyncmov %s552
  %s554 = vpop.sfrf %553
  %p555 = scmp.eq.s32.totalorder %s554, 0
  %p556 = pneg %p555
  %558 = shalt.err (%p556)
  %s559 = scalar_lea.sflag [#allocation3], 2
  %560 = vsyncmov %s559
  %s561 = vpop.sfrf %560
  %p562 = scmp.eq.s32.totalorder %s561, 0
  %p563 = pneg %p562
  %565 = shalt.err (%p563)
  %s566 = scalar_lea.sflag [#allocation3], 3
  %567 = vsyncmov %s566
  %s568 = vpop.sfrf %567
  %p569 = scmp.eq.s32.totalorder %s568, 0
  %p570 = pneg %p569
  %572 = shalt.err (%p570)
  %s573 = scalar_lea.sflag [#allocation3], 4
  %574 = vsyncmov %s573
  %s575 = vpop.sfrf %574
  %p576 = scmp.eq.s32.totalorder %s575, 0
  %p577 = pneg %p576
  %579 = shalt.err (%p577)
  %s580 = scalar_lea.sflag [#allocation3], 5
  %581 = vsyncmov %s580
  %s582 = vpop.sfrf %581
  %p583 = scmp.eq.s32.totalorder %s582, 0
  %p584 = pneg %p583
  %586 = shalt.err (%p584)
  %s587 = scalar_lea.sflag [#allocation3], 6
  %588 = vsyncmov %s587
  %s589 = vpop.sfrf %588
  %p590 = scmp.eq.s32.totalorder %s589, 0
  %p591 = pneg %p590
  %593 = shalt.err (%p591)
  %s594 = scalar_lea.sflag [#allocation3], 7
  %595 = vsyncmov %s594
  %s596 = vpop.sfrf %595
  %p597 = scmp.eq.s32.totalorder %s596, 0
  %p598 = pneg %p597
  %600 = shalt.err (%p598)

</llo_original>
